<compile_context>
chip_gen: v6e
topology: v6e:2x2x1
jax: 0.10.0
libtpu: 0.0.40
codegen_flags: <defaults>
</compile_context>

<pallas_src>
import numpy as np
import jax
import jax.numpy as jnp
from jax import lax
from jax.experimental import pallas as pl
from jax.experimental.pallas import tpu as pltpu


def _round_up(x: int, m: int) -> int:
    return ((x + m - 1) // m) * m


def _embedding_chars_kernel(x_ref, m_ref, b1_ref, w2_ref, b2_ref,
                            w3w_ref, b3w_ref, out_ref):
    # x_ref   : (TB, L)    int32  token indices for this batch tile
    # m_ref   : (L*V, H)   folded (embedding @ W1) matrix
    # b1_ref  : (1, H)
    # w2_ref  : (H, H), b2_ref: (1, H)
    # w3w_ref : (H, Npad)  W3 @ words, zero-padded to a 128-lane multiple
    # b3w_ref : (1, Npad)  b3 @ words, padded columns = -1e30
    # out_ref : (TB, Npad) softmax probabilities (padded columns ~ 0)
    TB, L = x_ref.shape
    LV = m_ref.shape[0]
    V = LV // L

    idx = x_ref[...]                                          # (TB, L) int32
    lane = lax.broadcasted_iota(jnp.int32, (TB, LV), 1)       # (TB, L*V)

    # Block one-hot: oh[b, l*V + v] = 1.0 iff x[b, l] == v.   (L is static.)
    oh = jnp.zeros((TB, LV), jnp.float32)
    for l in range(L):
        key_l = idx[:, l:l + 1] + l * V                       # (TB, 1)
        oh = oh + jnp.where(lane == key_l, 1.0, 0.0)

    # Layer 1 (embedding + Linear folded) + ReLU.
    h1 = jnp.dot(oh.astype(m_ref.dtype), m_ref[...],
                 preferred_element_type=jnp.float32) + b1_ref[...]
    h1 = jnp.maximum(h1, 0.0)

    # Layer 2 + ReLU.
    h2 = jnp.dot(h1.astype(w2_ref.dtype), w2_ref[...],
                 preferred_element_type=jnp.float32) + b2_ref[...]
    h2 = jnp.maximum(h2, 0.0)

    # Layer 3 with the one-hot word matrix folded in -> word logits.
    z = jnp.dot(h2.astype(w3w_ref.dtype), w3w_ref[...],
                preferred_element_type=jnp.float32) + b3w_ref[...]

    # Row softmax (max-stabilized); reciprocal on the EUP.
    z = z - jnp.max(z, axis=1, keepdims=True)
    e = jnp.exp(z)
    inv = pl.reciprocal(jnp.sum(e, axis=1, keepdims=True), approx=True)
    out_ref[...] = e * inv


def embedding_chars_forward(x, emb_table, w1, b1, w2, b2, w3, b3, words,
                            *, matmul_dtype=jnp.float32):
    """EmbeddingChars forward. Linear weights are stored (in_features, out_features)."""
    B, L = x.shape
    V, E = emb_table.shape
    K1, H = w1.shape
    assert K1 == L * E, (K1, L, E)
    n_words = words.shape[1]

    # ---- weight-only constant folding (exact) --------------------------------
    # Embedding + first Linear:  M[l*V + v, :] = emb_table[v] @ W1[l*E:(l+1)*E, :]
    w1_blocks = w1.reshape(L, E, H)
    m = jnp.einsum('ve,leh->lvh', emb_table, w1_blocks).reshape(L * V, H)
    # One-hot word matrix folded into the final Linear.
    w3w = jnp.dot(w3, words)                                  # (H, n_words)
    b3w = jnp.dot(b3, words)                                  # (1, n_words)

    # ---- lane-dense padding of the word axis ----------------------------------
    n_pad = _round_up(max(n_words, 1), 128)
    w3w_p = jnp.pad(w3w, ((0, 0), (0, n_pad - n_words)))
    b3w_p = jnp.pad(b3w, ((0, 0), (0, n_pad - n_words)), constant_values=-1e30)

    # Optional bf16 weights (recommended on v6e/v7x); accumulation stays f32.
    m = m.astype(matmul_dtype)
    w2c = w2.astype(matmul_dtype)
    w3w_p = w3w_p.astype(matmul_dtype)

    # ---- batch tiling ----------------------------------------------------------
    tb = 256 if B >= 256 else _round_up(B, 8)
    b_pad = _round_up(B, tb)
    x_p = jnp.pad(x.astype(jnp.int32), ((0, b_pad - B), (0, 0)))

    out_pad = pl.pallas_call(
        _embedding_chars_kernel,
        out_shape=jax.ShapeDtypeStruct((b_pad, n_pad), jnp.float32),
        grid=(b_pad // tb,),
        in_specs=[
            pl.BlockSpec((tb, L), lambda i: (i, 0)),        # x (batch-tiled)
            pl.BlockSpec((L * V, H), lambda i: (0, 0)),     # folded emb @ W1
            pl.BlockSpec((1, H), lambda i: (0, 0)),         # b1
            pl.BlockSpec((H, H), lambda i: (0, 0)),         # W2
            pl.BlockSpec((1, H), lambda i: (0, 0)),         # b2
            pl.BlockSpec((H, n_pad), lambda i: (0, 0)),     # W3 @ words (padded)
            pl.BlockSpec((1, n_pad), lambda i: (0, 0)),     # b3 @ words (padded)
        ],
        out_specs=pl.BlockSpec((tb, n_pad), lambda i: (i, 0)),
        compiler_params=pltpu.CompilerParams(
            dimension_semantics=("parallel",)),
    )(x_p, m, b1, w2c, b2, w3w_p, b3w_p)

    return out_pad[:B, :n_words]


def build_word_array(word_list):
    word_width = 26 * 5
    word_array = np.zeros((word_width, len(word_list)), dtype=np.float32)
    for i, word in enumerate(word_list):
        for j, c in enumerate(word):
            word_array[j * 26 + (ord(c) - ord('A')), i] = 1.0
    return word_array


if __name__ == "__main__":
    # Small deterministic shapes consistent with the module.
    obs_size = 16          # vocab size == sequence length of x
    emb_size = 8
    hidden_size = 32
    batch = 2
    word_width = 26 * 5    # 130
    word_list = ["APPLE", "BAKER", "CRANE", "DELTA", "EAGLE", "FROST",
                 "GHOST", "HOUSE", "IVORY", "JOKER", "KNIFE", "LEMON"]
    n_words = len(word_list)

    key = jax.random.PRNGKey(0)
    keys = jax.random.split(key, 8)

    # Deterministic synthetic parameters (not a checkpoint load).
    emb_table = jax.random.normal(keys[0], (obs_size, emb_size), jnp.float32) * 0.1
    w1 = jax.random.normal(keys[1], (obs_size * emb_size, hidden_size), jnp.float32) * 0.1
    b1 = jax.random.normal(keys[2], (1, hidden_size), jnp.float32) * 0.01
    w2 = jax.random.normal(keys[3], (hidden_size, hidden_size), jnp.float32) * 0.1
    b2 = jax.random.normal(keys[4], (1, hidden_size), jnp.float32) * 0.01
    w3 = jax.random.normal(keys[5], (hidden_size, word_width), jnp.float32) * 0.1
    b3 = jax.random.normal(keys[6], (1, word_width), jnp.float32) * 0.01
    words = jnp.asarray(build_word_array(word_list))          # (130, n_words)

    # Integer observation indices in [0, obs_size).
    x = jax.random.randint(keys[7], (batch, obs_size), 0, obs_size, dtype=jnp.int32)

    fwd = jax.jit(embedding_chars_forward)
    out = fwd(x, emb_table, w1, b1, w2, b2, w3, b3, words)
    out = jax.block_until_ready(out)

    # Pure-JAX reference of the original (unfolded) forward pass.
    emb_flat = jnp.take(emb_table, x, axis=0).reshape(batch, obs_size * emb_size)
    h1_ref = jax.nn.relu(emb_flat @ w1 + b1)
    h2_ref = jax.nn.relu(h1_ref @ w2 + b2)
    ref = jax.nn.softmax((h2_ref @ w3 + b3) @ words, axis=1)

    assert out.shape == (batch, n_words), out.shape
    assert bool(jnp.all(jnp.isfinite(out)))
    assert bool(jnp.allclose(jnp.sum(out, axis=1), 1.0, atol=5e-3))
    assert bool(jnp.allclose(out, ref, atol=2e-3, rtol=2e-3))
    print("KERNEL_OK")
</pallas_src>

<mosaic_0001>
module attributes {stable_mosaic.version = 11 : i64} {
  func.func @_embedding_chars_kernel(%arg0: i32, %arg1: memref<8x16xi32, #tpu.memory_space<vmem>>, %arg2: memref<256x32xf32, #tpu.memory_space<vmem>>, %arg3: memref<1x32xf32, #tpu.memory_space<vmem>>, %arg4: memref<32x32xf32, #tpu.memory_space<vmem>>, %arg5: memref<1x32xf32, #tpu.memory_space<vmem>>, %arg6: memref<32x128xf32, #tpu.memory_space<vmem>>, %arg7: memref<1x128xf32, #tpu.memory_space<vmem>>, %arg8: memref<8x128xf32, #tpu.memory_space<vmem>>) attributes {dimension_semantics = [#tpu.dimension_semantics<parallel>], iteration_bounds = array<i64: 1>, scalar_prefetch = 0 : i64, scratch_operands = 0 : i64, tpu.core_type = #tpu.core_type<tc>, window_params = [{transform_indices = @transform_0, window_bounds = array<i64: 8, 16>}, {pipeline_mode = #tpu.pipeline_mode<synchronous>, transform_indices = @transform_1, window_bounds = array<i64: 256, 32>}, {pipeline_mode = #tpu.pipeline_mode<synchronous>, transform_indices = @transform_2, window_bounds = array<i64: 1, 32>}, {pipeline_mode = #tpu.pipeline_mode<synchronous>, transform_indices = @transform_3, window_bounds = array<i64: 32, 32>}, {pipeline_mode = #tpu.pipeline_mode<synchronous>, transform_indices = @transform_4, window_bounds = array<i64: 1, 32>}, {pipeline_mode = #tpu.pipeline_mode<synchronous>, transform_indices = @transform_5, window_bounds = array<i64: 32, 128>}, {pipeline_mode = #tpu.pipeline_mode<synchronous>, transform_indices = @transform_6, window_bounds = array<i64: 1, 128>}, {transform_indices = @transform_7, window_bounds = array<i64: 8, 128>}]} {
    %c0 = arith.constant 0 : index
    %c0_0 = arith.constant 0 : index
    %0 = vector.load %arg1[%c0, %c0_0] : memref<8x16xi32, #tpu.memory_space<vmem>>, vector<8x16xi32>
    %1 = tpu.iota {dimensions = array<i32: 1>} : vector<8x256xi32>
    %cst = arith.constant 0.000000e+00 : f32
    %2 = vector.broadcast %cst : f32 to vector<8x256xf32>
    %3 = vector.extract_strided_slice %0 {offsets = [0, 0], sizes = [8, 1], strides = [1, 1]} : vector<8x16xi32> to vector<8x1xi32>
    %c0_i32 = arith.constant 0 : i32
    %4 = vector.broadcast %c0_i32 : i32 to vector<8x1xi32>
    %5 = arith.addi %3, %4 : vector<8x1xi32>
    %6 = vector.broadcast %5 : vector<8x1xi32> to vector<8x256xi32>
    %7 = arith.cmpi eq, %1, %6 : vector<8x256xi32>
    %cst_1 = arith.constant 1.000000e+00 : f32
    %cst_2 = arith.constant 0.000000e+00 : f32
    %8 = vector.broadcast %cst_1 : f32 to vector<8x256xf32>
    %9 = vector.broadcast %cst_2 : f32 to vector<8x256xf32>
    %10 = arith.select %7, %8, %9 : vector<8x256xi1>, vector<8x256xf32>
    %11 = arith.addf %2, %10 : vector<8x256xf32>
    %12 = vector.extract_strided_slice %0 {offsets = [0, 1], sizes = [8, 1], strides = [1, 1]} : vector<8x16xi32> to vector<8x1xi32>
    %c16_i32 = arith.constant 16 : i32
    %13 = vector.broadcast %c16_i32 : i32 to vector<8x1xi32>
    %14 = arith.addi %12, %13 : vector<8x1xi32>
    %15 = vector.broadcast %14 : vector<8x1xi32> to vector<8x256xi32>
    %16 = arith.cmpi eq, %1, %15 : vector<8x256xi32>
    %cst_3 = arith.constant 1.000000e+00 : f32
    %cst_4 = arith.constant 0.000000e+00 : f32
    %17 = vector.broadcast %cst_3 : f32 to vector<8x256xf32>
    %18 = vector.broadcast %cst_4 : f32 to vector<8x256xf32>
    %19 = arith.select %16, %17, %18 : vector<8x256xi1>, vector<8x256xf32>
    %20 = arith.addf %11, %19 : vector<8x256xf32>
    %21 = vector.extract_strided_slice %0 {offsets = [0, 2], sizes = [8, 1], strides = [1, 1]} : vector<8x16xi32> to vector<8x1xi32>
    %c32_i32 = arith.constant 32 : i32
    %22 = vector.broadcast %c32_i32 : i32 to vector<8x1xi32>
    %23 = arith.addi %21, %22 : vector<8x1xi32>
    %24 = vector.broadcast %23 : vector<8x1xi32> to vector<8x256xi32>
    %25 = arith.cmpi eq, %1, %24 : vector<8x256xi32>
    %cst_5 = arith.constant 1.000000e+00 : f32
    %cst_6 = arith.constant 0.000000e+00 : f32
    %26 = vector.broadcast %cst_5 : f32 to vector<8x256xf32>
    %27 = vector.broadcast %cst_6 : f32 to vector<8x256xf32>
    %28 = arith.select %25, %26, %27 : vector<8x256xi1>, vector<8x256xf32>
    %29 = arith.addf %20, %28 : vector<8x256xf32>
    %30 = vector.extract_strided_slice %0 {offsets = [0, 3], sizes = [8, 1], strides = [1, 1]} : vector<8x16xi32> to vector<8x1xi32>
    %c48_i32 = arith.constant 48 : i32
    %31 = vector.broadcast %c48_i32 : i32 to vector<8x1xi32>
    %32 = arith.addi %30, %31 : vector<8x1xi32>
    %33 = vector.broadcast %32 : vector<8x1xi32> to vector<8x256xi32>
    %34 = arith.cmpi eq, %1, %33 : vector<8x256xi32>
    %cst_7 = arith.constant 1.000000e+00 : f32
    %cst_8 = arith.constant 0.000000e+00 : f32
    %35 = vector.broadcast %cst_7 : f32 to vector<8x256xf32>
    %36 = vector.broadcast %cst_8 : f32 to vector<8x256xf32>
    %37 = arith.select %34, %35, %36 : vector<8x256xi1>, vector<8x256xf32>
    %38 = arith.addf %29, %37 : vector<8x256xf32>
    %39 = vector.extract_strided_slice %0 {offsets = [0, 4], sizes = [8, 1], strides = [1, 1]} : vector<8x16xi32> to vector<8x1xi32>
    %c64_i32 = arith.constant 64 : i32
    %40 = vector.broadcast %c64_i32 : i32 to vector<8x1xi32>
    %41 = arith.addi %39, %40 : vector<8x1xi32>
    %42 = vector.broadcast %41 : vector<8x1xi32> to vector<8x256xi32>
    %43 = arith.cmpi eq, %1, %42 : vector<8x256xi32>
    %cst_9 = arith.constant 1.000000e+00 : f32
    %cst_10 = arith.constant 0.000000e+00 : f32
    %44 = vector.broadcast %cst_9 : f32 to vector<8x256xf32>
    %45 = vector.broadcast %cst_10 : f32 to vector<8x256xf32>
    %46 = arith.select %43, %44, %45 : vector<8x256xi1>, vector<8x256xf32>
    %47 = arith.addf %38, %46 : vector<8x256xf32>
    %48 = vector.extract_strided_slice %0 {offsets = [0, 5], sizes = [8, 1], strides = [1, 1]} : vector<8x16xi32> to vector<8x1xi32>
    %c80_i32 = arith.constant 80 : i32
    %49 = vector.broadcast %c80_i32 : i32 to vector<8x1xi32>
    %50 = arith.addi %48, %49 : vector<8x1xi32>
    %51 = vector.broadcast %50 : vector<8x1xi32> to vector<8x256xi32>
    %52 = arith.cmpi eq, %1, %51 : vector<8x256xi32>
    %cst_11 = arith.constant 1.000000e+00 : f32
    %cst_12 = arith.constant 0.000000e+00 : f32
    %53 = vector.broadcast %cst_11 : f32 to vector<8x256xf32>
    %54 = vector.broadcast %cst_12 : f32 to vector<8x256xf32>
    %55 = arith.select %52, %53, %54 : vector<8x256xi1>, vector<8x256xf32>
    %56 = arith.addf %47, %55 : vector<8x256xf32>
    %57 = vector.extract_strided_slice %0 {offsets = [0, 6], sizes = [8, 1], strides = [1, 1]} : vector<8x16xi32> to vector<8x1xi32>
    %c96_i32 = arith.constant 96 : i32
    %58 = vector.broadcast %c96_i32 : i32 to vector<8x1xi32>
    %59 = arith.addi %57, %58 : vector<8x1xi32>
    %60 = vector.broadcast %59 : vector<8x1xi32> to vector<8x256xi32>
    %61 = arith.cmpi eq, %1, %60 : vector<8x256xi32>
    %cst_13 = arith.constant 1.000000e+00 : f32
    %cst_14 = arith.constant 0.000000e+00 : f32
    %62 = vector.broadcast %cst_13 : f32 to vector<8x256xf32>
    %63 = vector.broadcast %cst_14 : f32 to vector<8x256xf32>
    %64 = arith.select %61, %62, %63 : vector<8x256xi1>, vector<8x256xf32>
    %65 = arith.addf %56, %64 : vector<8x256xf32>
    %66 = vector.extract_strided_slice %0 {offsets = [0, 7], sizes = [8, 1], strides = [1, 1]} : vector<8x16xi32> to vector<8x1xi32>
    %c112_i32 = arith.constant 112 : i32
    %67 = vector.broadcast %c112_i32 : i32 to vector<8x1xi32>
    %68 = arith.addi %66, %67 : vector<8x1xi32>
    %69 = vector.broadcast %68 : vector<8x1xi32> to vector<8x256xi32>
    %70 = arith.cmpi eq, %1, %69 : vector<8x256xi32>
    %cst_15 = arith.constant 1.000000e+00 : f32
    %cst_16 = arith.constant 0.000000e+00 : f32
    %71 = vector.broadcast %cst_15 : f32 to vector<8x256xf32>
    %72 = vector.broadcast %cst_16 : f32 to vector<8x256xf32>
    %73 = arith.select %70, %71, %72 : vector<8x256xi1>, vector<8x256xf32>
    %74 = arith.addf %65, %73 : vector<8x256xf32>
    %75 = vector.extract_strided_slice %0 {offsets = [0, 8], sizes = [8, 1], strides = [1, 1]} : vector<8x16xi32> to vector<8x1xi32>
    %c128_i32 = arith.constant 128 : i32
    %76 = vector.broadcast %c128_i32 : i32 to vector<8x1xi32>
    %77 = arith.addi %75, %76 : vector<8x1xi32>
    %78 = vector.broadcast %77 : vector<8x1xi32> to vector<8x256xi32>
    %79 = arith.cmpi eq, %1, %78 : vector<8x256xi32>
    %cst_17 = arith.constant 1.000000e+00 : f32
    %cst_18 = arith.constant 0.000000e+00 : f32
    %80 = vector.broadcast %cst_17 : f32 to vector<8x256xf32>
    %81 = vector.broadcast %cst_18 : f32 to vector<8x256xf32>
    %82 = arith.select %79, %80, %81 : vector<8x256xi1>, vector<8x256xf32>
    %83 = arith.addf %74, %82 : vector<8x256xf32>
    %84 = vector.extract_strided_slice %0 {offsets = [0, 9], sizes = [8, 1], strides = [1, 1]} : vector<8x16xi32> to vector<8x1xi32>
    %c144_i32 = arith.constant 144 : i32
    %85 = vector.broadcast %c144_i32 : i32 to vector<8x1xi32>
    %86 = arith.addi %84, %85 : vector<8x1xi32>
    %87 = vector.broadcast %86 : vector<8x1xi32> to vector<8x256xi32>
    %88 = arith.cmpi eq, %1, %87 : vector<8x256xi32>
    %cst_19 = arith.constant 1.000000e+00 : f32
    %cst_20 = arith.constant 0.000000e+00 : f32
    %89 = vector.broadcast %cst_19 : f32 to vector<8x256xf32>
    %90 = vector.broadcast %cst_20 : f32 to vector<8x256xf32>
    %91 = arith.select %88, %89, %90 : vector<8x256xi1>, vector<8x256xf32>
    %92 = arith.addf %83, %91 : vector<8x256xf32>
    %93 = vector.extract_strided_slice %0 {offsets = [0, 10], sizes = [8, 1], strides = [1, 1]} : vector<8x16xi32> to vector<8x1xi32>
    %c160_i32 = arith.constant 160 : i32
    %94 = vector.broadcast %c160_i32 : i32 to vector<8x1xi32>
    %95 = arith.addi %93, %94 : vector<8x1xi32>
    %96 = vector.broadcast %95 : vector<8x1xi32> to vector<8x256xi32>
    %97 = arith.cmpi eq, %1, %96 : vector<8x256xi32>
    %cst_21 = arith.constant 1.000000e+00 : f32
    %cst_22 = arith.constant 0.000000e+00 : f32
    %98 = vector.broadcast %cst_21 : f32 to vector<8x256xf32>
    %99 = vector.broadcast %cst_22 : f32 to vector<8x256xf32>
    %100 = arith.select %97, %98, %99 : vector<8x256xi1>, vector<8x256xf32>
    %101 = arith.addf %92, %100 : vector<8x256xf32>
    %102 = vector.extract_strided_slice %0 {offsets = [0, 11], sizes = [8, 1], strides = [1, 1]} : vector<8x16xi32> to vector<8x1xi32>
    %c176_i32 = arith.constant 176 : i32
    %103 = vector.broadcast %c176_i32 : i32 to vector<8x1xi32>
    %104 = arith.addi %102, %103 : vector<8x1xi32>
    %105 = vector.broadcast %104 : vector<8x1xi32> to vector<8x256xi32>
    %106 = arith.cmpi eq, %1, %105 : vector<8x256xi32>
    %cst_23 = arith.constant 1.000000e+00 : f32
    %cst_24 = arith.constant 0.000000e+00 : f32
    %107 = vector.broadcast %cst_23 : f32 to vector<8x256xf32>
    %108 = vector.broadcast %cst_24 : f32 to vector<8x256xf32>
    %109 = arith.select %106, %107, %108 : vector<8x256xi1>, vector<8x256xf32>
    %110 = arith.addf %101, %109 : vector<8x256xf32>
    %111 = vector.extract_strided_slice %0 {offsets = [0, 12], sizes = [8, 1], strides = [1, 1]} : vector<8x16xi32> to vector<8x1xi32>
    %c192_i32 = arith.constant 192 : i32
    %112 = vector.broadcast %c192_i32 : i32 to vector<8x1xi32>
    %113 = arith.addi %111, %112 : vector<8x1xi32>
    %114 = vector.broadcast %113 : vector<8x1xi32> to vector<8x256xi32>
    %115 = arith.cmpi eq, %1, %114 : vector<8x256xi32>
    %cst_25 = arith.constant 1.000000e+00 : f32
    %cst_26 = arith.constant 0.000000e+00 : f32
    %116 = vector.broadcast %cst_25 : f32 to vector<8x256xf32>
    %117 = vector.broadcast %cst_26 : f32 to vector<8x256xf32>
    %118 = arith.select %115, %116, %117 : vector<8x256xi1>, vector<8x256xf32>
    %119 = arith.addf %110, %118 : vector<8x256xf32>
    %120 = vector.extract_strided_slice %0 {offsets = [0, 13], sizes = [8, 1], strides = [1, 1]} : vector<8x16xi32> to vector<8x1xi32>
    %c208_i32 = arith.constant 208 : i32
    %121 = vector.broadcast %c208_i32 : i32 to vector<8x1xi32>
    %122 = arith.addi %120, %121 : vector<8x1xi32>
    %123 = vector.broadcast %122 : vector<8x1xi32> to vector<8x256xi32>
    %124 = arith.cmpi eq, %1, %123 : vector<8x256xi32>
    %cst_27 = arith.constant 1.000000e+00 : f32
    %cst_28 = arith.constant 0.000000e+00 : f32
    %125 = vector.broadcast %cst_27 : f32 to vector<8x256xf32>
    %126 = vector.broadcast %cst_28 : f32 to vector<8x256xf32>
    %127 = arith.select %124, %125, %126 : vector<8x256xi1>, vector<8x256xf32>
    %128 = arith.addf %119, %127 : vector<8x256xf32>
    %129 = vector.extract_strided_slice %0 {offsets = [0, 14], sizes = [8, 1], strides = [1, 1]} : vector<8x16xi32> to vector<8x1xi32>
    %c224_i32 = arith.constant 224 : i32
    %130 = vector.broadcast %c224_i32 : i32 to vector<8x1xi32>
    %131 = arith.addi %129, %130 : vector<8x1xi32>
    %132 = vector.broadcast %131 : vector<8x1xi32> to vector<8x256xi32>
    %133 = arith.cmpi eq, %1, %132 : vector<8x256xi32>
    %cst_29 = arith.constant 1.000000e+00 : f32
    %cst_30 = arith.constant 0.000000e+00 : f32
    %134 = vector.broadcast %cst_29 : f32 to vector<8x256xf32>
    %135 = vector.broadcast %cst_30 : f32 to vector<8x256xf32>
    %136 = arith.select %133, %134, %135 : vector<8x256xi1>, vector<8x256xf32>
    %137 = arith.addf %128, %136 : vector<8x256xf32>
    %138 = vector.extract_strided_slice %0 {offsets = [0, 15], sizes = [8, 1], strides = [1, 1]} : vector<8x16xi32> to vector<8x1xi32>
    %c240_i32 = arith.constant 240 : i32
    %139 = vector.broadcast %c240_i32 : i32 to vector<8x1xi32>
    %140 = arith.addi %138, %139 : vector<8x1xi32>
    %141 = vector.broadcast %140 : vector<8x1xi32> to vector<8x256xi32>
    %142 = arith.cmpi eq, %1, %141 : vector<8x256xi32>
    %cst_31 = arith.constant 1.000000e+00 : f32
    %cst_32 = arith.constant 0.000000e+00 : f32
    %143 = vector.broadcast %cst_31 : f32 to vector<8x256xf32>
    %144 = vector.broadcast %cst_32 : f32 to vector<8x256xf32>
    %145 = arith.select %142, %143, %144 : vector<8x256xi1>, vector<8x256xf32>
    %146 = arith.addf %137, %145 : vector<8x256xf32>
    %c0_33 = arith.constant 0 : index
    %c0_34 = arith.constant 0 : index
    %147 = vector.load %arg2[%c0_33, %c0_34] : memref<256x32xf32, #tpu.memory_space<vmem>>, vector<256x32xf32>
    %cst_35 = arith.constant dense<0.000000e+00> : vector<8x32xf32>
    %148 = tpu.matmul %146, %147, %cst_35 {dimension_numbers = #tpu.dot_dimension_numbers<[1], [0], [0], [1], [0, 0, 1, 1], [], []>} : vector<8x256xf32>, vector<256x32xf32>, vector<8x32xf32> -> vector<8x32xf32>
    %c0_36 = arith.constant 0 : index
    %c0_37 = arith.constant 0 : index
    %149 = vector.load %arg3[%c0_36, %c0_37] : memref<1x32xf32, #tpu.memory_space<vmem>>, vector<1x32xf32>
    %150 = vector.broadcast %149 : vector<1x32xf32> to vector<8x32xf32>
    %151 = arith.addf %148, %150 : vector<8x32xf32>
    %cst_38 = arith.constant 0.000000e+00 : f32
    %152 = vector.broadcast %cst_38 : f32 to vector<8x32xf32>
    %153 = arith.maximumf %151, %152 : vector<8x32xf32>
    %c0_39 = arith.constant 0 : index
    %c0_40 = arith.constant 0 : index
    %154 = vector.load %arg4[%c0_39, %c0_40] : memref<32x32xf32, #tpu.memory_space<vmem>>, vector<32x32xf32>
    %cst_41 = arith.constant dense<0.000000e+00> : vector<8x32xf32>
    %155 = tpu.matmul %153, %154, %cst_41 {dimension_numbers = #tpu.dot_dimension_numbers<[1], [0], [0], [1], [0, 0, 1, 1], [], []>} : vector<8x32xf32>, vector<32x32xf32>, vector<8x32xf32> -> vector<8x32xf32>
    %c0_42 = arith.constant 0 : index
    %c0_43 = arith.constant 0 : index
    %156 = vector.load %arg5[%c0_42, %c0_43] : memref<1x32xf32, #tpu.memory_space<vmem>>, vector<1x32xf32>
    %157 = vector.broadcast %156 : vector<1x32xf32> to vector<8x32xf32>
    %158 = arith.addf %155, %157 : vector<8x32xf32>
    %cst_44 = arith.constant 0.000000e+00 : f32
    %159 = vector.broadcast %cst_44 : f32 to vector<8x32xf32>
    %160 = arith.maximumf %158, %159 : vector<8x32xf32>
    %c0_45 = arith.constant 0 : index
    %c0_46 = arith.constant 0 : index
    %161 = vector.load %arg6[%c0_45, %c0_46] : memref<32x128xf32, #tpu.memory_space<vmem>>, vector<32x128xf32>
    %cst_47 = arith.constant dense<0.000000e+00> : vector<8x128xf32>
    %162 = tpu.matmul %160, %161, %cst_47 {dimension_numbers = #tpu.dot_dimension_numbers<[1], [0], [0], [1], [0, 0, 1, 1], [], []>} : vector<8x32xf32>, vector<32x128xf32>, vector<8x128xf32> -> vector<8x128xf32>
    %c0_48 = arith.constant 0 : index
    %c0_49 = arith.constant 0 : index
    %163 = vector.load %arg7[%c0_48, %c0_49] : memref<1x128xf32, #tpu.memory_space<vmem>>, vector<1x128xf32>
    %164 = vector.broadcast %163 : vector<1x128xf32> to vector<8x128xf32>
    %165 = arith.addf %162, %164 : vector<8x128xf32>
    %cst_50 = arith.constant dense<0xFF800000> : vector<8xf32>
    %166 = vector.multi_reduction <maximumf>, %165, %cst_50 [1] : vector<8x128xf32> to vector<8xf32>
    %167 = vector.shape_cast %166 : vector<8xf32> to vector<8x1xf32>
    %168 = vector.broadcast %167 : vector<8x1xf32> to vector<8x128xf32>
    %169 = arith.subf %165, %168 : vector<8x128xf32>
    %170 = math.exp %169 : vector<8x128xf32>
    %cst_51 = arith.constant dense<0.000000e+00> : vector<8xf32>
    %171 = vector.multi_reduction <add>, %170, %cst_51 [1] : vector<8x128xf32> to vector<8xf32>
    %172 = vector.shape_cast %171 : vector<8xf32> to vector<8x1xf32>
    %173 = tpu.reciprocal %172 {approx = true} : vector<8x1xf32> -> vector<8x1xf32>
    %174 = vector.broadcast %173 : vector<8x1xf32> to vector<8x128xf32>
    %175 = arith.mulf %170, %174 : vector<8x128xf32>
    %c0_52 = arith.constant 0 : index
    %c0_53 = arith.constant 0 : index
    %176 = vector.load %arg8[%c0_52, %c0_53] : memref<8x128xf32, #tpu.memory_space<vmem>>, vector<8x128xf32>
    tpu.vector_store %arg8[%c0_52, %c0_53], %175 {strides = array<i32>} : memref<8x128xf32, #tpu.memory_space<vmem>>, vector<8x128xf32>,
    return
  }
  func.func @transform_0(%arg0: i32) -> (i32, i32) {
    %c0_i32 = arith.constant 0 : i32
    %c0_i32_0 = arith.constant 0 : i32
    return %arg0, %c0_i32 : i32, i32
  }
  func.func @transform_1(%arg0: i32) -> (i32, i32) {
    %c0_i32 = arith.constant 0 : i32
    %c0_i32_0 = arith.constant 0 : i32
    %c0_i32_1 = arith.constant 0 : i32
    return %c0_i32, %c0_i32_0 : i32, i32
  }
  func.func @transform_2(%arg0: i32) -> (i32, i32) {
    %c0_i32 = arith.constant 0 : i32
    %c0_i32_0 = arith.constant 0 : i32
    %c0_i32_1 = arith.constant 0 : i32
    return %c0_i32, %c0_i32_0 : i32, i32
  }
  func.func @transform_3(%arg0: i32) -> (i32, i32) {
    %c0_i32 = arith.constant 0 : i32
    %c0_i32_0 = arith.constant 0 : i32
    %c0_i32_1 = arith.constant 0 : i32
    return %c0_i32, %c0_i32_0 : i32, i32
  }
  func.func @transform_4(%arg0: i32) -> (i32, i32) {
    %c0_i32 = arith.constant 0 : i32
    %c0_i32_0 = arith.constant 0 : i32
    %c0_i32_1 = arith.constant 0 : i32
    return %c0_i32, %c0_i32_0 : i32, i32
  }
  func.func @transform_5(%arg0: i32) -> (i32, i32) {
    %c0_i32 = arith.constant 0 : i32
    %c0_i32_0 = arith.constant 0 : i32
    %c0_i32_1 = arith.constant 0 : i32
    return %c0_i32, %c0_i32_0 : i32, i32
  }
  func.func @transform_6(%arg0: i32) -> (i32, i32) {
    %c0_i32 = arith.constant 0 : i32
    %c0_i32_0 = arith.constant 0 : i32
    %c0_i32_1 = arith.constant 0 : i32
    return %c0_i32, %c0_i32_0 : i32, i32
  }
  func.func @transform_7(%arg0: i32) -> (i32, i32) {
    %c0_i32 = arith.constant 0 : i32
    %c0_i32_0 = arith.constant 0 : i32
    return %arg0, %c0_i32 : i32, i32
  }
}

</mosaic_0001>

<llo_original>
// kernel: embedding_chars_forward.1
$region0: #{embedding_chars_forward.1}
  #allocation0 [shape = 'u32[]', space=smem, size = 0x4, offset = 0x4, fixed_abs, tag = 'smem constant byte address 0x4 - core index']
  #allocation1 [shape = 'u32[144,128]{1,0:T(1,128)}', space=vmem, size = 0x12000, scoped, tag = 'internal scratch']
  %s0 = inlined_call_operand.vmem [shape: s32[8,16], index: 0, kind: input, shape index: {}]
  %s1 = inlined_call_operand.vmem [shape: f32[256,32], index: 1, kind: input, shape index: {}]
  %s2 = inlined_call_operand.vmem [shape: f32[1,32], index: 2, kind: input, shape index: {}]
  %s3 = inlined_call_operand.vmem [shape: f32[32,32], index: 3, kind: input, shape index: {}]
  %s4 = inlined_call_operand.vmem [shape: f32[1,32], index: 4, kind: input, shape index: {}]
  %s5 = inlined_call_operand.vmem [shape: f32[32,128], index: 5, kind: input, shape index: {}]
  %s6 = inlined_call_operand.vmem [shape: f32[1,128], index: 6, kind: input, shape index: {}]
  %s7 = inlined_call_operand.vmem [shape: f32[8,128], index: 7, kind: output, shape index: {}]
  %s8 = sld [smem:[#allocation0]]
  $region38: #{embedding_chars_forward.1} parent=0
    _
  %s10 = ssub.s32 1, %s8
  %s11 = scalar_select 0, %s10, %s8
  // Predicated region
  $region2: #{embedding_chars_forward.1} parent=0 // pred_check
    _
  $region3: #{embedding_chars_forward.1} parent=0 // pred_check_branch
    %13 = sbr.rel (0) target = $region5
  $region4: #{embedding_chars_forward.1} parent=0 // pred_region
    _
  $region5: #{embedding_chars_forward.1} parent=0 // pred_fallthru
    _
  // Predicated region
  $region6: #{embedding_chars_forward.1} parent=0 // pred_check
    _
  $region7: #{embedding_chars_forward.1} parent=0 // pred_check_branch
    %15 = sbr.rel (0) target = $region9
  $region8: #{embedding_chars_forward.1} parent=0 // pred_region
    _
  $region9: #{embedding_chars_forward.1} parent=0 // pred_fallthru
    _
  // Predicated region
  $region10: #{embedding_chars_forward.1} parent=0 // pred_check
    _
  $region11: #{embedding_chars_forward.1} parent=0 // pred_check_branch
    %17 = sbr.rel (0) target = $region13
  $region12: #{embedding_chars_forward.1} parent=0 // pred_region
    _
  $region13: #{embedding_chars_forward.1} parent=0 // pred_fallthru
    _
  // Predicated region
  $region14: #{embedding_chars_forward.1} parent=0 // pred_check
    _
  $region15: #{embedding_chars_forward.1} parent=0 // pred_check_branch
    %19 = sbr.rel (0) target = $region17
  $region16: #{embedding_chars_forward.1} parent=0 // pred_region
    _
  $region17: #{embedding_chars_forward.1} parent=0 // pred_fallthru
    _
  // Predicated region
  $region18: #{embedding_chars_forward.1} parent=0 // pred_check
    _
  $region19: #{embedding_chars_forward.1} parent=0 // pred_check_branch
    %21 = sbr.rel (0) target = $region21
  $region20: #{embedding_chars_forward.1} parent=0 // pred_region
    _
  $region21: #{embedding_chars_forward.1} parent=0 // pred_fallthru
    _
  // Predicated region
  $region22: #{embedding_chars_forward.1} parent=0 // pred_check
    _
  $region23: #{embedding_chars_forward.1} parent=0 // pred_check_branch
    %23 = sbr.rel (0) target = $region25
  $region24: #{embedding_chars_forward.1} parent=0 // pred_region
    _
  $region25: #{embedding_chars_forward.1} parent=0 // pred_fallthru
    _
  // Predicated region
  $region26: #{embedding_chars_forward.1} parent=0 // pred_check
    _
  $region27: #{embedding_chars_forward.1} parent=0 // pred_check_branch
    %25 = sbr.rel (0) target = $region29
  $region28: #{embedding_chars_forward.1} parent=0 // pred_region
    _
  $region29: #{embedding_chars_forward.1} parent=0 // pred_fallthru
    _
  %v26 = vld [vmem:[%s0] sm:$0xff]
  %v27 = vlaneseq
  %v28 = vand.u32 %v27, 127
  %v29 = vadd.s32 %v28, 128
  %30 = vset.pattern.permute.xlu0 0
  %31 = vperm.xlu0 %30, %v26
  %v32 = vpop.permute.xlu0 %31
  %vm33 = vcmp.eq.s32.totalorder %v28, %v32
  %vm34 = vcmp.eq.s32.totalorder %v29, %v32
  %v35 = vsel %vm33, 1.0, 0.0
  %v36 = vsel %vm34, 1.0, 0.0
  %v37 = vadd.f32 %v35, 0.0
  %v38 = vadd.f32 %v36, 0.0
  %v39 = vadd.s32 %v26, 16
  %40 = vset.pattern.permute.xlu0 1
  %41 = vperm.xlu0 %40, %v39
  %v42 = vpop.permute.xlu0 %41
  %vm43 = vcmp.eq.s32.totalorder %v28, %v42
  %vm44 = vcmp.eq.s32.totalorder %v29, %v42
  %v45 = vsel %vm43, 1.0, 0.0
  %v46 = vsel %vm44, 1.0, 0.0
  %v47 = vadd.f32 %v37, %v45
  %v48 = vadd.f32 %v38, %v46
  %v49 = vadd.s32 %v26, 32
  %50 = vset.pattern.permute.xlu0 2
  %51 = vperm.xlu0 %50, %v49
  %v52 = vpop.permute.xlu0 %51
  %vm53 = vcmp.eq.s32.totalorder %v28, %v52
  %vm54 = vcmp.eq.s32.totalorder %v29, %v52
  %v55 = vsel %vm53, 1.0, 0.0
  %v56 = vsel %vm54, 1.0, 0.0
  %v57 = vadd.f32 %v47, %v55
  %v58 = vadd.f32 %v48, %v56
  %v59 = vadd.s32 %v26, 48
  %60 = vset.pattern.permute.xlu0 3
  %61 = vperm.xlu0 %60, %v59
  %v62 = vpop.permute.xlu0 %61
  %vm63 = vcmp.eq.s32.totalorder %v28, %v62
  %vm64 = vcmp.eq.s32.totalorder %v29, %v62
  %v65 = vsel %vm63, 1.0, 0.0
  %v66 = vsel %vm64, 1.0, 0.0
  %v67 = vadd.f32 %v57, %v65
  %v68 = vadd.f32 %v58, %v66
  %v69 = vadd.s32 %v26, 64
  %70 = vset.pattern.permute.xlu0 4
  %71 = vperm.xlu0 %70, %v69
  %v72 = vpop.permute.xlu0 %71
  %vm73 = vcmp.eq.s32.totalorder %v28, %v72
  %vm74 = vcmp.eq.s32.totalorder %v29, %v72
  %v75 = vsel %vm73, 1.0, 0.0
  %v76 = vsel %vm74, 1.0, 0.0
  %v77 = vadd.f32 %v67, %v75
  %v78 = vadd.f32 %v68, %v76
  %v79 = vadd.s32 %v26, 80
  %80 = vset.pattern.permute.xlu0 5
  %81 = vperm.xlu0 %80, %v79
  %v82 = vpop.permute.xlu0 %81
  %vm83 = vcmp.eq.s32.totalorder %v28, %v82
  %vm84 = vcmp.eq.s32.totalorder %v29, %v82
  %v85 = vsel %vm83, 1.0, 0.0
  %v86 = vsel %vm84, 1.0, 0.0
  %v87 = vadd.f32 %v77, %v85
  %v88 = vadd.f32 %v78, %v86
  %v89 = vadd.s32 %v26, 96
  %90 = vset.pattern.permute.xlu0 6
  %91 = vperm.xlu0 %90, %v89
  %v92 = vpop.permute.xlu0 %91
  %vm93 = vcmp.eq.s32.totalorder %v28, %v92
  %vm94 = vcmp.eq.s32.totalorder %v29, %v92
  %v95 = vsel %vm93, 1.0, 0.0
  %v96 = vsel %vm94, 1.0, 0.0
  %v97 = vadd.f32 %v87, %v95
  %v98 = vadd.f32 %v88, %v96
  %v99 = vadd.s32 %v26, 112
  %100 = vset.pattern.permute.xlu0 7
  %101 = vperm.xlu0 %100, %v99
  %v102 = vpop.permute.xlu0 %101
  %vm103 = vcmp.eq.s32.totalorder %v28, %v102
  %vm104 = vcmp.eq.s32.totalorder %v29, %v102
  %v105 = vsel %vm103, 1.0, 0.0
  %v106 = vsel %vm104, 1.0, 0.0
  %v107 = vadd.f32 %v97, %v105
  %v108 = vadd.f32 %v98, %v106
  %v109 = vadd.s32 %v26, 128
  %110 = vset.pattern.permute.xlu0 8
  %111 = vperm.xlu0 %110, %v109
  %v112 = vpop.permute.xlu0 %111
  %vm113 = vcmp.eq.s32.totalorder %v28, %v112
  %vm114 = vcmp.eq.s32.totalorder %v29, %v112
  %v115 = vsel %vm113, 1.0, 0.0
  %v116 = vsel %vm114, 1.0, 0.0
  %v117 = vadd.f32 %v107, %v115
  %v118 = vadd.f32 %v108, %v116
  %v119 = vadd.s32 %v26, 144
  %120 = vset.pattern.permute.xlu0 9
  %121 = vperm.xlu0 %120, %v119
  %v122 = vpop.permute.xlu0 %121
  %vm123 = vcmp.eq.s32.totalorder %v28, %v122
  %vm124 = vcmp.eq.s32.totalorder %v29, %v122
  %v125 = vsel %vm123, 1.0, 0.0
  %v126 = vsel %vm124, 1.0, 0.0
  %v127 = vadd.f32 %v117, %v125
  %v128 = vadd.f32 %v118, %v126
  %v129 = vadd.s32 %v26, 160
  %130 = vset.pattern.permute.xlu0 10
  %131 = vperm.xlu0 %130, %v129
  %v132 = vpop.permute.xlu0 %131
  %vm133 = vcmp.eq.s32.totalorder %v28, %v132
  %vm134 = vcmp.eq.s32.totalorder %v29, %v132
  %v135 = vsel %vm133, 1.0, 0.0
  %v136 = vsel %vm134, 1.0, 0.0
  %v137 = vadd.f32 %v127, %v135
  %v138 = vadd.f32 %v128, %v136
  %v139 = vadd.s32 %v26, 176
  %140 = vset.pattern.permute.xlu0 11
  %141 = vperm.xlu0 %140, %v139
  %v142 = vpop.permute.xlu0 %141
  %vm143 = vcmp.eq.s32.totalorder %v28, %v142
  %vm144 = vcmp.eq.s32.totalorder %v29, %v142
  %v145 = vsel %vm143, 1.0, 0.0
  %v146 = vsel %vm144, 1.0, 0.0
  %v147 = vadd.f32 %v137, %v145
  %v148 = vadd.f32 %v138, %v146
  %v149 = vadd.s32 %v26, 192
  %150 = vset.pattern.permute.xlu0 12
  %151 = vperm.xlu0 %150, %v149
  %v152 = vpop.permute.xlu0 %151
  %vm153 = vcmp.eq.s32.totalorder %v28, %v152
  %vm154 = vcmp.eq.s32.totalorder %v29, %v152
  %v155 = vsel %vm153, 1.0, 0.0
  %v156 = vsel %vm154, 1.0, 0.0
  %v157 = vadd.f32 %v147, %v155
  %v158 = vadd.f32 %v148, %v156
  %v159 = vadd.s32 %v26, 208
  %160 = vset.pattern.permute.xlu0 13
  %161 = vperm.xlu0 %160, %v159
  %v162 = vpop.permute.xlu0 %161
  %vm163 = vcmp.eq.s32.totalorder %v28, %v162
  %vm164 = vcmp.eq.s32.totalorder %v29, %v162
  %v165 = vsel %vm163, 1.0, 0.0
  %v166 = vsel %vm164, 1.0, 0.0
  %v167 = vadd.f32 %v157, %v165
  %v168 = vadd.f32 %v158, %v166
  %v169 = vadd.s32 %v26, 224
  %170 = vset.pattern.permute.xlu0 14
  %171 = vperm.xlu0 %170, %v169
  %v172 = vpop.permute.xlu0 %171
  %vm173 = vcmp.eq.s32.totalorder %v28, %v172
  %vm174 = vcmp.eq.s32.totalorder %v29, %v172
  %v175 = vsel %vm173, 1.0, 0.0
  %v176 = vsel %vm174, 1.0, 0.0
  %v177 = vadd.f32 %v167, %v175
  %v178 = vadd.f32 %v168, %v176
  %v179 = vadd.s32 %v26, 240
  %180 = vset.pattern.permute.xlu0 15
  %181 = vperm.xlu0 %180, %v179
  %v182 = vpop.permute.xlu0 %181
  %vm183 = vcmp.eq.s32.totalorder %v28, %v182
  %vm184 = vcmp.eq.s32.totalorder %v29, %v182
  %v185 = vsel %vm183, 1.0, 0.0
  %v186 = vsel %vm184, 1.0, 0.0
  %v187 = vadd.f32 %v177, %v185
  %v188 = vadd.f32 %v178, %v186
  %v189 = vld [vmem:[%s1] sm:$0xff]
  %v190 = vld [vmem:[%s1 + $0x8] sm:$0xff]
  %v191 = vld [vmem:[%s1 + $0x10] sm:$0xff]
  %v192 = vld [vmem:[%s1 + $0x18] sm:$0xff]
  %v193 = vld [vmem:[%s1 + $0x20] sm:$0xff]
  %v194 = vld [vmem:[%s1 + $0x28] sm:$0xff]
  %v195 = vld [vmem:[%s1 + $0x30] sm:$0xff]
  %v196 = vld [vmem:[%s1 + $0x38] sm:$0xff]
  %v197 = vld [vmem:[%s1 + $0x40] sm:$0xff]
  %v198 = vld [vmem:[%s1 + $0x48] sm:$0xff]
  %v199 = vld [vmem:[%s1 + $0x50] sm:$0xff]
  %v200 = vld [vmem:[%s1 + $0x58] sm:$0xff]
  %v201 = vld [vmem:[%s1 + $0x60] sm:$0xff]
  %v202 = vld [vmem:[%s1 + $0x68] sm:$0xff]
  %v203 = vld [vmem:[%s1 + $0x70] sm:$0xff]
  %v204 = vld [vmem:[%s1 + $0x78] sm:$0xff]
  %v205 = vld [vmem:[%s1 + $0x80] sm:$0xff]
  %v206 = vld [vmem:[%s1 + $0x88] sm:$0xff]
  %v207 = vld [vmem:[%s1 + $0x90] sm:$0xff]
  %v208 = vld [vmem:[%s1 + $0x98] sm:$0xff]
  %v209 = vld [vmem:[%s1 + $0xa0] sm:$0xff]
  %v210 = vld [vmem:[%s1 + $0xa8] sm:$0xff]
  %v211 = vld [vmem:[%s1 + $0xb0] sm:$0xff]
  %v212 = vld [vmem:[%s1 + $0xb8] sm:$0xff]
  %v213 = vld [vmem:[%s1 + $0xc0] sm:$0xff]
  %v214 = vld [vmem:[%s1 + $0xc8] sm:$0xff]
  %v215 = vld [vmem:[%s1 + $0xd0] sm:$0xff]
  %v216 = vld [vmem:[%s1 + $0xd8] sm:$0xff]
  %v217 = vld [vmem:[%s1 + $0xe0] sm:$0xff]
  %v218 = vld [vmem:[%s1 + $0xe8] sm:$0xff]
  %v219 = vld [vmem:[%s1 + $0xf0] sm:$0xff]
  %v220 = vld [vmem:[%s1 + $0xf8] sm:$0xff]
  %v221 = vld [vmem:[%s2] sm:$0x1]
  %v223 = vlaneseq
  %v224 = vshrl.u32 %v223, 7
  %v225 = vsub.s32 0, %v224
  %v226 = vrot.slane %v221, %v225
  %228 = vmatprep.subr.mxu0 0.0
  %229 = vmatpush1.msra.mxu0 %v204
  %230 = vmatprep.subr.mxu0 0.0
  %231 = vmatpush1.msra.mxu0 %v203
  %232 = vmatprep.subr.mxu0 0.0
  %233 = vmatpush1.msra.mxu0 %v202
  %234 = vmatprep.subr.mxu0 0.0
  %235 = vmatpush1.msra.mxu0 %v201
  %236 = vmatprep.subr.mxu0 0.0
  %237 = vmatpush1.msra.mxu0 %v200
  %238 = vmatprep.subr.mxu0 0.0
  %239 = vmatpush1.msra.mxu0 %v199
  %240 = vmatprep.subr.mxu0 0.0
  %241 = vmatpush1.msra.mxu0 %v198
  %242 = vmatprep.subr.mxu0 0.0
  %243 = vmatpush1.msra.mxu0 %v197
  %244 = vmatprep.subr.mxu0 0.0
  %245 = vmatpush1.msra.mxu0 %v196
  %246 = vmatprep.subr.mxu0 0.0
  %247 = vmatpush1.msra.mxu0 %v195
  %248 = vmatprep.subr.mxu0 0.0
  %249 = vmatpush1.msra.mxu0 %v194
  %250 = vmatprep.subr.mxu0 0.0
  %251 = vmatpush1.msra.mxu0 %v193
  %252 = vmatprep.subr.mxu0 0.0
  %253 = vmatpush1.msra.mxu0 %v192
  %254 = vmatprep.subr.mxu0 0.0
  %255 = vmatpush1.msra.mxu0 %v191
  %256 = vmatprep.subr.mxu0 0.0
  %257 = vmatpush1.msra.mxu0 %v190
  %258 = vmatprep.subr.mxu0 0.0
  %259 = vmatpush1.msra.mxu0 %v189
  %260 = vmatprep.subr.mxu0 0.0
  %261 = vmatpush2.msra.mxu0 %v220
  %262 = vmatprep.subr.mxu0 0.0
  %263 = vmatpush2.msra.mxu0 %v219
  %264 = vmatprep.subr.mxu0 0.0
  %265 = vmatpush2.msra.mxu0 %v218
  %266 = vmatprep.subr.mxu0 0.0
  %267 = vmatpush2.msra.mxu0 %v217
  %268 = vmatprep.subr.mxu0 0.0
  %269 = vmatpush2.msra.mxu0 %v216
  %270 = vmatprep.subr.mxu0 0.0
  %271 = vmatpush2.msra.mxu0 %v215
  %272 = vmatprep.subr.mxu0 0.0
  %273 = vmatpush2.msra.mxu0 %v214
  %274 = vmatprep.subr.mxu0 0.0
  %275 = vmatpush2.msra.mxu0 %v213
  %276 = vmatprep.subr.mxu0 0.0
  %277 = vmatpush2.msra.mxu0 %v212
  %278 = vmatprep.subr.mxu0 0.0
  %279 = vmatpush2.msra.mxu0 %v211
  %280 = vmatprep.subr.mxu0 0.0
  %281 = vmatpush2.msra.mxu0 %v210
  %282 = vmatprep.subr.mxu0 0.0
  %283 = vmatpush2.msra.mxu0 %v209
  %284 = vmatprep.subr.mxu0 0.0
  %285 = vmatpush2.msra.mxu0 %v208
  %286 = vmatprep.subr.mxu0 0.0
  %287 = vmatpush2.msra.mxu0 %v207
  %288 = vmatprep.subr.mxu0 0.0
  %289 = vmatpush2.msra.mxu0 %v206
  %290 = vmatprep.subr.mxu0 0.0
  %291 = vmatpush2.msra.mxu0 %v205
  %292 = vmatprep.mubr.f32.mxu0 %v188
  %293 = vmatmul.mubr.f32.gmra.mxu0 %v187
  %v294 = vpop.f32.mrf.mxu0
  %v295 = vadd.f32 %v226, %v294
  %v296 = vpop.f32.mrf.mxu0
  %297 = vdwg.mxu0
  %v298 = vmax.f32 %v295, 0.0
  %v299 = vld [vmem:[%s3] sm:$0xff]
  %v300 = vld [vmem:[%s3 + $0x8] sm:$0xff]
  %v301 = vld [vmem:[%s3 + $0x10] sm:$0xff]
  %v302 = vld [vmem:[%s3 + $0x18] sm:$0xff]
  %v303 = vld [vmem:[%s4] sm:$0x1]
  %v305 = vlaneseq
  %v306 = vshrl.u32 %v305, 7
  %v307 = vsub.s32 0, %v306
  %v308 = vrot.slane %v303, %v307
  %vm310 = vcmask 261120
  %v312 = vsel %vm310, %v298, 0
  %314 = vmatprep.subr.mxu0 0.0
  %315 = vmatpush1.msra.mxu0 0.0
  %316 = vmatprep.subr.mxu0 0.0
  %317 = vmatpush1.msra.mxu0 0.0
  %318 = vmatprep.subr.mxu0 0.0
  %319 = vmatpush1.msra.mxu0 0.0
  %320 = vmatprep.subr.mxu0 0.0
  %321 = vmatpush1.msra.mxu0 0.0
  %322 = vmatprep.subr.mxu0 0.0
  %323 = vmatpush1.msra.mxu0 0.0
  %324 = vmatprep.subr.mxu0 0.0
  %325 = vmatpush1.msra.mxu0 0.0
  %326 = vmatprep.subr.mxu0 0.0
  %327 = vmatpush1.msra.mxu0 0.0
  %328 = vmatprep.subr.mxu0 0.0
  %329 = vmatpush1.msra.mxu0 0.0
  %330 = vmatprep.subr.mxu0 0.0
  %331 = vmatpush1.msra.mxu0 0.0
  %332 = vmatprep.subr.mxu0 0.0
  %333 = vmatpush1.msra.mxu0 0.0
  %334 = vmatprep.subr.mxu0 0.0
  %335 = vmatpush1.msra.mxu0 0.0
  %336 = vmatprep.subr.mxu0 0.0
  %337 = vmatpush1.msra.mxu0 0.0
  %338 = vmatprep.subr.mxu0 0.0
  %339 = vmatpush1.msra.mxu0 %v302
  %340 = vmatprep.subr.mxu0 0.0
  %341 = vmatpush1.msra.mxu0 %v301
  %342 = vmatprep.subr.mxu0 0.0
  %343 = vmatpush1.msra.mxu0 %v300
  %344 = vmatprep.subr.mxu0 0.0
  %345 = vmatpush1.msra.mxu0 %v299
  %346 = vmatprep.subr.mxu0 0.0
  %347 = vmatpush2.msra.mxu0 0.0
  %348 = vmatprep.subr.mxu0 0.0
  %349 = vmatpush2.msra.mxu0 0.0
  %350 = vmatprep.subr.mxu0 0.0
  %351 = vmatpush2.msra.mxu0 0.0
  %352 = vmatprep.subr.mxu0 0.0
  %353 = vmatpush2.msra.mxu0 0.0
  %354 = vmatprep.subr.mxu0 0.0
  %355 = vmatpush2.msra.mxu0 0.0
  %356 = vmatprep.subr.mxu0 0.0
  %357 = vmatpush2.msra.mxu0 0.0
  %358 = vmatprep.subr.mxu0 0.0
  %359 = vmatpush2.msra.mxu0 0.0
  %360 = vmatprep.subr.mxu0 0.0
  %361 = vmatpush2.msra.mxu0 0.0
  %362 = vmatprep.subr.mxu0 0.0
  %363 = vmatpush2.msra.mxu0 0.0
  %364 = vmatprep.subr.mxu0 0.0
  %365 = vmatpush2.msra.mxu0 0.0
  %366 = vmatprep.subr.mxu0 0.0
  %367 = vmatpush2.msra.mxu0 0.0
  %368 = vmatprep.subr.mxu0 0.0
  %369 = vmatpush2.msra.mxu0 0.0
  %370 = vmatprep.subr.mxu0 0.0
  %371 = vmatpush2.msra.mxu0 0.0
  %372 = vmatprep.subr.mxu0 0.0
  %373 = vmatpush2.msra.mxu0 0.0
  %374 = vmatprep.subr.mxu0 0.0
  %375 = vmatpush2.msra.mxu0 0.0
  %376 = vmatprep.subr.mxu0 0.0
  %377 = vmatpush2.msra.mxu0 0.0
  %378 = vmatprep.mubr.f32.mxu0 0.0
  %379 = vmatmul.mubr.f32.gmra.mxu0 %v312
  %v380 = vpop.f32.mrf.mxu0
  %v381 = vadd.f32 %v308, %v380
  %v382 = vpop.f32.mrf.mxu0
  %383 = vdwg.mxu0
  %v384 = vmax.f32 %v381, 0.0
  %v385 = vld [vmem:[%s5] sm:$0xff]
  %v386 = vld [vmem:[%s5 + $0x8] sm:$0xff]
  %v387 = vld [vmem:[%s5 + $0x10] sm:$0xff]
  %v388 = vld [vmem:[%s5 + $0x18] sm:$0xff]
  %v389 = vld [vmem:[%s6] sm:$0x1]
  %v391 = vlaneseq
  %v392 = vshrl.u32 %v391, 7
  %v393 = vsub.s32 0, %v392
  %v394 = vrot.slane %v389, %v393
  %v397 = vsel %vm310, %v384, 0
  %399 = vmatprep.subr.mxu0 0.0
  %400 = vmatpush1.msra.mxu0 0.0
  %401 = vmatprep.subr.mxu0 0.0
  %402 = vmatpush1.msra.mxu0 0.0
  %403 = vmatprep.subr.mxu0 0.0
  %404 = vmatpush1.msra.mxu0 0.0
  %405 = vmatprep.subr.mxu0 0.0
  %406 = vmatpush1.msra.mxu0 0.0
  %407 = vmatprep.subr.mxu0 0.0
  %408 = vmatpush1.msra.mxu0 0.0
  %409 = vmatprep.subr.mxu0 0.0
  %410 = vmatpush1.msra.mxu0 0.0
  %411 = vmatprep.subr.mxu0 0.0
  %412 = vmatpush1.msra.mxu0 0.0
  %413 = vmatprep.subr.mxu0 0.0
  %414 = vmatpush1.msra.mxu0 0.0
  %415 = vmatprep.subr.mxu0 0.0
  %416 = vmatpush1.msra.mxu0 0.0
  %417 = vmatprep.subr.mxu0 0.0
  %418 = vmatpush1.msra.mxu0 0.0
  %419 = vmatprep.subr.mxu0 0.0
  %420 = vmatpush1.msra.mxu0 0.0
  %421 = vmatprep.subr.mxu0 0.0
  %422 = vmatpush1.msra.mxu0 0.0
  %423 = vmatprep.subr.mxu0 0.0
  %424 = vmatpush1.msra.mxu0 %v388
  %425 = vmatprep.subr.mxu0 0.0
  %426 = vmatpush1.msra.mxu0 %v387
  %427 = vmatprep.subr.mxu0 0.0
  %428 = vmatpush1.msra.mxu0 %v386
  %429 = vmatprep.subr.mxu0 0.0
  %430 = vmatpush1.msra.mxu0 %v385
  %431 = vmatprep.subr.mxu0 0.0
  %432 = vmatpush2.msra.mxu0 0.0
  %433 = vmatprep.subr.mxu0 0.0
  %434 = vmatpush2.msra.mxu0 0.0
  %435 = vmatprep.subr.mxu0 0.0
  %436 = vmatpush2.msra.mxu0 0.0
  %437 = vmatprep.subr.mxu0 0.0
  %438 = vmatpush2.msra.mxu0 0.0
  %439 = vmatprep.subr.mxu0 0.0
  %440 = vmatpush2.msra.mxu0 0.0
  %441 = vmatprep.subr.mxu0 0.0
  %442 = vmatpush2.msra.mxu0 0.0
  %443 = vmatprep.subr.mxu0 0.0
  %444 = vmatpush2.msra.mxu0 0.0
  %445 = vmatprep.subr.mxu0 0.0
  %446 = vmatpush2.msra.mxu0 0.0
  %447 = vmatprep.subr.mxu0 0.0
  %448 = vmatpush2.msra.mxu0 0.0
  %449 = vmatprep.subr.mxu0 0.0
  %450 = vmatpush2.msra.mxu0 0.0
  %451 = vmatprep.subr.mxu0 0.0
  %452 = vmatpush2.msra.mxu0 0.0
  %453 = vmatprep.subr.mxu0 0.0
  %454 = vmatpush2.msra.mxu0 0.0
  %455 = vmatprep.subr.mxu0 0.0
  %456 = vmatpush2.msra.mxu0 0.0
  %457 = vmatprep.subr.mxu0 0.0
  %458 = vmatpush2.msra.mxu0 0.0
  %459 = vmatprep.subr.mxu0 0.0
  %460 = vmatpush2.msra.mxu0 0.0
  %461 = vmatprep.subr.mxu0 0.0
  %462 = vmatpush2.msra.mxu0 0.0
  %463 = vmatprep.mubr.f32.mxu0 0.0
  %464 = vmatmul.mubr.f32.gmra.mxu0 %v397
  %v465 = vpop.f32.mrf.mxu0
  %v466 = vadd.f32 %v394, %v465
  %v467 = vpop.f32.mrf.mxu0
  %468 = vdwg.mxu0
  %469 = vmax.xlane.f32.xlu0 %v466
  %v470 = vpop.xlane.xlu0 %469
  %v471 = vsub.f32 %v466, %v470
  %v472 = vmul.f32 %v471, 1.442695
  %v473 = vpow.pop %v472
  %474 = vadd.xlane.f32.xlu0 %v473
  %v475 = vpop.xlane.xlu0 %474
  %v476 = vrcp.pop %v475
  %v477 = vmul.f32 %v473, %v476
  %478 = vst [vmem:[%s7] sm:$0xff] %v477
  // Predicated region
  $region30: #{embedding_chars_forward.1} parent=0 // pred_check
    _
  $region31: #{embedding_chars_forward.1} parent=0 // pred_check_branch
    %480 = sbr.rel (0) target = $region33
  $region32: #{embedding_chars_forward.1} parent=0 // pred_region
    _
  $region33: #{embedding_chars_forward.1} parent=0 // pred_fallthru
    _
  // Predicated region
  $region34: #{embedding_chars_forward.1} parent=0 // pred_check
    _
  $region35: #{embedding_chars_forward.1} parent=0 // pred_check_branch
    %482 = sbr.rel (0) target = $region37
  $region36: #{embedding_chars_forward.1} parent=0 // pred_region
    _
  $region37: #{embedding_chars_forward.1} parent=0 // pred_fallthru
    _

</llo_original>
